<compile_context>
chip_gen: v7x
topology: tpu7x:2x2x1
jax: 0.10.0
libtpu: 0.0.40
codegen_flags: <defaults>
</compile_context>

<pallas_src>
import functools

import jax
import jax.numpy as jnp
from jax.experimental import pallas as pl
from jax.experimental.pallas import tpu as pltpu


COEF = 0.97              # matches PreEmphasis(coef=0.97)

_LANE = 128              # vreg lane width
_SUBLANE = 8             # vreg sublane width (f32)
_MAX_TT = 32768          # max time (lane) tile
_MAX_TB = 64             # max batch (sublane) tile
_PER_BUF_BYTES = 8 * 1024 * 1024    # target bytes per pipeline buffer
_VMEM_LIMIT = 40 * 1024 * 1024      # scoped VMEM limit (safe on v5e/v6e/v7x)


def _round_up(n: int, m: int) -> int:
    return ((n + m - 1) // m) * m


def _pick_batch_tile(batch: int, max_tb: int) -> int:
    """Largest multiple-of-8 divisor of `batch` <= max_tb; prefer >=2 blocks."""
    cands = [d for d in range(_SUBLANE, max_tb + 1, _SUBLANE) if batch % d == 0]
    if not cands:
        return batch                 # full extent: exempt from the (8,128) rule
    halves = [d for d in cands if d <= batch // 2]
    # >=2 blocks on the "parallel" batch axis keeps both v7x TCs busy even
    # when the time axis has a single tile.
    return max(halves) if (batch >= 16 and halves) else max(cands)


def _preemphasis_kernel(x_ref, peek_ref, o_ref, *, coef):
    # x_ref:    (tb, tt)  input tile  x[:, t*tt : (t+1)*tt]
    # peek_ref: (tb, 128) input block x[:, (t+1)*tt : (t+1)*tt + 128]
    # o_ref:    (tb, tt)  output tile y[:, t*tt : (t+1)*tt]
    xv = x_ref[...]                                   # single load of the tile
    tt = xv.shape[1]
    c = jnp.asarray(coef, xv.dtype)

    # nxt[:, j] = xv[:, (j+1) % tt]   (XLU lane rotate, not VALU)
    nxt = pltpu.roll(xv, shift=tt - 1, axis=1)
    o_ref[...] = nxt - c * xv

    # Narrow seam fixup: the tile's last output column needs the first sample
    # of the *next* tile, supplied by the peek block.  (tb, 1) masked store —
    # no full-tile iota/compare/select.
    o_ref[:, tt - 1:tt] = peek_ref[:, 0:1] - c * xv[:, tt - 1:tt]


def pre_emphasis(x: jax.Array, coef: float = COEF, *,
                 max_batch_tile: int = _MAX_TB,
                 max_time_tile: int = _MAX_TT) -> jax.Array:
    """x: (B, 1, T) -> (B, T-1), matching the PyTorch PreEmphasis module."""
    assert x.ndim == 3 and x.shape[1] == 1, "expected NCW input with C_in == 1"
    assert max_time_tile % _LANE == 0 and max_batch_tile % _SUBLANE == 0
    B, _, T = x.shape
    assert T >= 2, "need at least 2 samples along time"
    x2d = x.reshape(B, T)
    itemsize = jnp.dtype(x.dtype).itemsize

    # --- batch tiling -------------------------------------------------------
    tb = _pick_batch_tile(B, max_batch_tile)
    n_b = pl.cdiv(B, tb)                      # exact: tb divides B or tb == B

    # --- balanced time tiling -----------------------------------------------
    # Keep one (tb, tt) buffer <= ~8 MiB, then split T-1 into the minimum
    # number of equal (128-aligned) tiles so padding waste stays < 128 lanes
    # per tile even for long, unaligned audio.
    tt_cap = max(_LANE, (_PER_BUF_BYTES // (tb * itemsize)) // _LANE * _LANE)
    tt_max = min(max_time_tile, tt_cap)
    t_out = T - 1
    n_t = pl.cdiv(t_out, tt_max)
    tt = _round_up(pl.cdiv(t_out, n_t), _LANE)
    w_out = n_t * tt                          # lane-dense padded output width
    w_in = w_out + _LANE                      # room for the last tile's peek
    mult = tt // _LANE                        # peek block-index multiplier

    x_pad = jnp.pad(x2d, ((0, 0), (0, w_in - T)))
    # TODO(synk): under a larger jit the pad above and the final [:, :T-1]
    # trim fuse with neighbours; standalone they are extra HBM copies.

    cost = pl.CostEstimate(
        flops=2 * B * w_out,
        transcendentals=0,
        bytes_accessed=(B * w_in + B * w_out) * itemsize,
    )

    y_full = pl.pallas_call(
        functools.partial(_preemphasis_kernel, coef=coef),
        out_shape=jax.ShapeDtypeStruct((B, w_out), x.dtype),
        grid=(n_b, n_t),
        in_specs=[
            pl.BlockSpec((tb, tt), lambda i, t: (i, t)),
            pl.BlockSpec((tb, _LANE), lambda i, t: (i, (t + 1) * mult)),
        ],
        out_specs=pl.BlockSpec((tb, tt), lambda i, t: (i, t)),
        compiler_params=pltpu.CompilerParams(
            # No cross-iteration state (no carry), so both axes are parallel:
            # megacore can shard batch *or* time on v7x.
            dimension_semantics=("parallel", "parallel"),
            vmem_limit_bytes=_VMEM_LIMIT,
        ),
        cost_estimate=cost,
    )(x_pad, x_pad)

    return y_full if w_out == t_out else y_full[:, :t_out]


def _reference(x: jax.Array, coef: float = COEF) -> jax.Array:
    return x[:, 0, 1:] - coef * x[:, 0, :-1]


if __name__ == "__main__":
    key = jax.random.PRNGKey(0)

    # 1) Small demo at module-consistent shapes (NCW with C_in = 1).
    B, C, T = 2, 1, 16
    x = jax.random.normal(key, (B, C, T), dtype=jnp.float32)
    y = jax.block_until_ready(pre_emphasis(x))
    assert y.shape == (B, T - 1), y.shape
    assert jnp.allclose(y, _reference(x), atol=1e-6, rtol=1e-6)

    # 2) Multi time-tile path: 3 tiles of 256, exercising the peek seam.
    B2, T2 = 2, 700
    x2 = jax.random.normal(jax.random.PRNGKey(0), (B2, 1, T2), dtype=jnp.float32)
    y2 = jax.block_until_ready(pre_emphasis(x2, max_time_tile=256))
    assert y2.shape == (B2, T2 - 1), y2.shape
    assert jnp.allclose(y2, _reference(x2), atol=1e-6, rtol=1e-6)

    # 3) Multi batch-block path: tb = 8 -> two "parallel" batch blocks.
    B3, T3 = 16, 300
    x3 = jax.random.normal(jax.random.PRNGKey(0), (B3, 1, T3), dtype=jnp.float32)
    y3 = jax.block_until_ready(pre_emphasis(x3))
    assert y3.shape == (B3, T3 - 1), y3.shape
    assert jnp.allclose(y3, _reference(x3), atol=1e-6, rtol=1e-6)

    print("KERNEL_OK")
</pallas_src>

<mosaic_0001>
module attributes {stable_mosaic.version = 11 : i64} {
  func.func @_preemphasis_kernel(%arg0: i32, %arg1: i32, %arg2: memref<2x128xf32, #tpu.memory_space<vmem>>, %arg3: memref<2x128xf32, #tpu.memory_space<vmem>>, %arg4: memref<2x128xf32, #tpu.memory_space<vmem>>) attributes {dimension_semantics = [#tpu.dimension_semantics<parallel>, #tpu.dimension_semantics<parallel>], iteration_bounds = array<i64: 1, 1>, scalar_prefetch = 0 : i64, scratch_operands = 0 : i64, tpu.core_type = #tpu.core_type<tc>, window_params = [{transform_indices = @transform_0, window_bounds = array<i64: 2, 128>}, {transform_indices = @transform_1, window_bounds = array<i64: 2, 128>}, {transform_indices = @transform_2, window_bounds = array<i64: 2, 128>}]} {
    %c0 = arith.constant 0 : index
    %c0_0 = arith.constant 0 : index
    %0 = vector.load %arg2[%c0, %c0_0] : memref<2x128xf32, #tpu.memory_space<vmem>>, vector<2x128xf32>
    %c127_i32 = arith.constant 127 : i32
    %1 = tpu.dynamic_rotate %0 by %c127_i32 dim 1 : vector<2x128xf32>, i32 -> vector<2x128xf32>
    %cst = arith.constant 9.700000e-01 : f32
    %2 = vector.broadcast %cst : f32 to vector<2x128xf32>
    %3 = arith.mulf %2, %0 : vector<2x128xf32>
    %4 = arith.subf %1, %3 : vector<2x128xf32>
    %c0_1 = arith.constant 0 : index
    %c0_2 = arith.constant 0 : index
    %5 = vector.load %arg4[%c0_1, %c0_2] : memref<2x128xf32, #tpu.memory_space<vmem>>, vector<2x128xf32>
    tpu.vector_store %arg4[%c0_1, %c0_2], %4 {strides = array<i32>} : memref<2x128xf32, #tpu.memory_space<vmem>>, vector<2x128xf32>,
    %c0_3 = arith.constant 0 : index
    %c0_4 = arith.constant 0 : index
    %6 = vector.load %arg3[%c0_3, %c0_4] : memref<2x128xf32, #tpu.memory_space<vmem>>, vector<2x1xf32>
    %7 = vector.extract_strided_slice %0 {offsets = [0, 127], sizes = [2, 1], strides = [1, 1]} : vector<2x128xf32> to vector<2x1xf32>
    %cst_5 = arith.constant 9.700000e-01 : f32
    %8 = vector.broadcast %cst_5 : f32 to vector<2x1xf32>
    %9 = arith.mulf %8, %7 : vector<2x1xf32>
    %10 = arith.subf %6, %9 : vector<2x1xf32>
    %c0_6 = arith.constant 0 : index
    %c127 = arith.constant 127 : index
    %11 = vector.load %arg4[%c0_6, %c127] : memref<2x128xf32, #tpu.memory_space<vmem>>, vector<2x1xf32>
    tpu.vector_store %arg4[%c0_6, %c127], %10 {strides = array<i32>} : memref<2x128xf32, #tpu.memory_space<vmem>>, vector<2x1xf32>,
    return
  }
  func.func @transform_0(%arg0: i32, %arg1: i32) -> (i32, i32) {
    %c0_i32 = arith.constant 0 : i32
    return %arg0, %arg1 : i32, i32
  }
  func.func @transform_1(%arg0: i32, %arg1: i32) -> (i32, i32) {
    %c1_i32 = arith.constant 1 : i32
    %0 = arith.addi %arg1, %c1_i32 : i32
    %c1_i32_0 = arith.constant 1 : i32
    %1 = arith.muli %0, %c1_i32_0 : i32
    %c0_i32 = arith.constant 0 : i32
    return %arg0, %1 : i32, i32
  }
  func.func @transform_2(%arg0: i32, %arg1: i32) -> (i32, i32) {
    %c0_i32 = arith.constant 0 : i32
    return %arg0, %arg1 : i32, i32
  }
}

</mosaic_0001>

<llo_original>
// kernel: tpu_custom_call.1
$region0: #{tpu_custom_call.1}
  #allocation0 [shape = 'u32[]', space=smem, size = 0x4, offset = 0x4, fixed_abs, tag = 'smem constant byte address 0x4 - core index']
  #allocation1 [shape = 'u32[144,128]{1,0:T(1,128)}', space=vmem, size = 0x12000, scoped, tag = 'internal scratch']
  %s0 = inlined_call_operand.hbm [shape: f32[2,256], index: 0, kind: input, shape index: {}]
  %s1 = inlined_call_operand.hbm [shape: f32[2,256], index: 1, kind: input, shape index: {}]
  %s2 = inlined_call_operand.hbm [shape: f32[2,128], index: 2, kind: output, shape index: {}]
  %s3 = sld [smem:[#allocation0]]
  $region26: #{tpu_custom_call.1} parent=0
    _
  %s5 = ssub.s32 1, %s3
  %s6 = scalar_select 0, %s5, %s3
  $region1: #{tpu_custom_call.1} parent=0
    #allocation2 [shape = 'u8[1024]{0}', space=vmem, size = 0x400, scoped, tag = 'input window, operand 0, single buffered']
    #allocation3 [shape = 's32[1]{0}', space=sflag, size = 0x4, scoped, tag = 'scoped memory for tpu_custom_call.1']
    #allocation4 [shape = 's32[1]{0}', space=sflag, size = 0x4, scoped, tag = 'scoped memory for tpu_custom_call.1']
    #allocation5 [shape = 'u8[1024]{0}', space=vmem, size = 0x400, scoped, tag = 'input window, operand 1, single buffered']
    #allocation6 [shape = 's32[1]{0}', space=sflag, size = 0x4, scoped, tag = 'scoped memory for tpu_custom_call.1']
    #allocation7 [shape = 'u8[1024]{0}', space=vmem, size = 0x400, scoped, tag = 'output window, operand 0, single buffered']
    %7 = vsyncpa [#allocation3], 0
    %8 = vsyncpa [#allocation6], 0
    %9 = vsyncpa [#allocation4], 0
    // Predicated region
    $region2: #{tpu_custom_call.1} parent=1 // pred_check
      _
    $region3: #{tpu_custom_call.1} parent=1 // pred_check_branch
      %11 = sbr.rel (0) target = $region5
    $region4: #{tpu_custom_call.1} parent=1 // pred_region
      %s13 = ssub.s32 32, 32
      %14 = vsyncadd [#allocation3], %s13
      %s16 = sshll.u32 [#allocation2], 4
      %s17 = int_to_ptr.vmem [resolvable:$true] %s16
      %19 = dma.hbm_to_vmem [thread:$0]  %s0, 32, %s17, [#allocation3]
    $region5: #{tpu_custom_call.1} parent=1 // pred_fallthru
      _
    // Predicated region
    $region6: #{tpu_custom_call.1} parent=1 // pred_check
      _
    $region7: #{tpu_custom_call.1} parent=1 // pred_check_branch
      %21 = sbr.rel (0) target = $region9
    $region8: #{tpu_custom_call.1} parent=1 // pred_region
      %s22 = sadd.s32 0, 1
      %s24 = ssub.s32 32, 32
      %25 = vsyncadd [#allocation6], %s24
      %s26 = smul.addr %s22, 32
      %s27 = scalar_lea.hbm %s1, %s26
      %s29 = sshll.u32 [#allocation5], 4
      %s30 = int_to_ptr.vmem [resolvable:$true] %s29
      %32 = dma.hbm_to_vmem [thread:$0]  %s27, 32, %s30, [#allocation6]
    $region9: #{tpu_custom_call.1} parent=1 // pred_fallthru
      _
    // Predicated region
    $region10: #{tpu_custom_call.1} parent=1 // pred_check
      _
    $region11: #{tpu_custom_call.1} parent=1 // pred_check_branch
      %34 = sbr.rel (0) target = $region13
    $region12: #{tpu_custom_call.1} parent=1 // pred_region
      %35 = dma.done [#allocation3], 32
    $region13: #{tpu_custom_call.1} parent=1 // pred_fallthru
      _
    // Predicated region
    $region14: #{tpu_custom_call.1} parent=1 // pred_check
      _
    $region15: #{tpu_custom_call.1} parent=1 // pred_check_branch
      %37 = sbr.rel (0) target = $region17
    $region16: #{tpu_custom_call.1} parent=1 // pred_region
      %38 = dma.done [#allocation6], 32
    $region17: #{tpu_custom_call.1} parent=1 // pred_fallthru
      _
    %s39 = sadd.s32 0, 1
    %v40 = vld [vmem:[#allocation2] sm:$0x3]
    %41 = vrot.lane.b32.xlu0 %v40, 127
    %v42 = vpop.permute.xlu0 %41
    %v43 = vmul.f32 %v40, 0.97
    %v44 = vsub.f32 %v42, %v43
    %45 = vst [vmem:[#allocation7] sm:$0x3] %v44
    %v46 = vld [vmem:[#allocation5] sm:$0x3]
    %48 = vrot.lane.b32.xlu0 %v43, 1
    %v49 = vpop.permute.xlu0 %48
    %v51 = vsub.f32 %v46, %v49
    %53 = vrot.lane.b32.xlu0 %v51, 127
    %v54 = vpop.permute.xlu0 %53
    %vm56 = vcmask 1042424
    %57 = vst.msk [vmem:[#allocation7] sm:$0x3] %vm56, %v54
    // Predicated region
    $region18: #{tpu_custom_call.1} parent=1 // pred_check
      _
    $region19: #{tpu_custom_call.1} parent=1 // pred_check_branch
      %59 = sbr.rel (0) target = $region21
    $region20: #{tpu_custom_call.1} parent=1 // pred_region
      %s61 = ssub.s32 32, 32
      %62 = vsyncadd [#allocation4], %s61
      %s64 = sshll.u32 [#allocation7], 4
      %s65 = int_to_ptr.vmem [resolvable:$true] %s64
      %67 = dma.vmem_to_hbm [thread:$0]  %s65, 32, %s2, [#allocation4]
    $region21: #{tpu_custom_call.1} parent=1 // pred_fallthru
      _
    // Predicated region
    $region22: #{tpu_custom_call.1} parent=1 // pred_check
      _
    $region23: #{tpu_custom_call.1} parent=1 // pred_check_branch
      %69 = sbr.rel (0) target = $region25
    $region24: #{tpu_custom_call.1} parent=1 // pred_region
      %70 = dma.done [#allocation4], 32
    $region25: #{tpu_custom_call.1} parent=1 // pred_fallthru
      _
    %71 = vsyncpa [#allocation3], 1
    %72 = vsyncpa [#allocation6], 1
    %73 = vsyncpa [#allocation4], 1

</llo_original>
